<compile_context>
chip_gen: v5e
topology: v5e:2x2
jax: 0.10.0
libtpu: 0.0.40
codegen_flags: <defaults>
</compile_context>

<pallas_src>
import functools

import jax
import jax.numpy as jnp
from jax import lax
from jax.experimental import pallas as pl
from jax.experimental.pallas import tpu as pltpu

_LANE = 128
_TARGET_TILE_BYTES = 4 << 20     # ~4 MiB per (larger-dtype) tile
_MIN_GRID_STEPS = 2              # so both v7x TensorCores get work on the parallel axis
_VMEM_LIMIT_BYTES = 32 * 1024 * 1024


def _sublane_multiple(dtype):
    # vreg second-minor packing: 8 rows (32-bit), 16 (16-bit), 32 (8-bit)
    return max(8, 32 // jnp.dtype(dtype).itemsize)


def _poly(x, c, q):
    """c * x ** q with x already in the output dtype (static python c, q)."""
    out_dtype = x.dtype
    if isinstance(q, int):
        # NOTE: integer lmbd above 2^24 squared in f32 can differ slightly from
        # torch's integer pow followed by float multiply; negligible for masks.
        xq = x if q == 1 else lax.integer_pow(x, q)
    else:
        # Fractional exponent: compute exp(q*log x) in f32 even for bf16/f16
        # outputs (matches PyTorch numerics more closely; op stays mem-bound).
        xf = x.astype(jnp.float32) if jnp.issubdtype(out_dtype, jnp.floating) else x
        xq = jnp.power(xf, jnp.asarray(q, dtype=xf.dtype)).astype(out_dtype)
    if isinstance(c, (int, float)) and c == 1:
        return xq
    return (jnp.asarray(c, dtype=out_dtype) * xq).astype(out_dtype)


def _poly_mask_kernel(x_ref, o_ref, *, c, q):
    x = x_ref[...].astype(o_ref.dtype)
    o_ref[...] = _poly(x, c, q).astype(o_ref.dtype)


def _pick_block_rows(rows, lane_w, itemsize, sub):
    """Rows per block: multiple of `sub`, ~4 MiB per tile, and >=2 grid steps
    whenever the row count allows (so v7x's two TCs both stream)."""
    tgt = _TARGET_TILE_BYTES // max(1, lane_w * itemsize)
    tgt = max(sub, (tgt // sub) * sub)
    if rows >= _MIN_GRID_STEPS * sub:
        cap = max(sub, (rows // _MIN_GRID_STEPS // sub) * sub)
        tgt = min(tgt, cap)
    # If tgt >= rows we return the full row extent (block == full dim, always legal).
    return min(tgt, rows)


def _cost_estimate(n, in_dtype, out_dtype, c, q):
    if isinstance(q, int):
        flops = n * max(q - 1, 0)
        transcendentals = 0
    else:
        flops = n
        transcendentals = 2 * n            # log + exp per element
    if not (isinstance(c, (int, float)) and c == 1):
        flops += n
    bytes_accessed = n * (jnp.dtype(in_dtype).itemsize + jnp.dtype(out_dtype).itemsize)
    return pl.CostEstimate(flops=flops, transcendentals=transcendentals,
                           bytes_accessed=bytes_accessed)


def _run_2d(x2d, out_dtype, c, q, block_rows, *, alias=False):
    rows, lane_w = x2d.shape
    grid = (pl.cdiv(rows, block_rows),)
    kernel = functools.partial(_poly_mask_kernel, c=c, q=q)
    return pl.pallas_call(
        kernel,
        out_shape=jax.ShapeDtypeStruct((rows, lane_w), out_dtype),
        grid_spec=pltpu.PrefetchScalarGridSpec(
            num_scalar_prefetch=0,
            grid=grid,
            in_specs=[pl.BlockSpec((block_rows, lane_w), lambda i: (i, 0))],
            out_specs=pl.BlockSpec((block_rows, lane_w), lambda i: (i, 0)),
        ),
        compiler_params=pltpu.CompilerParams(
            dimension_semantics=("parallel",),
            vmem_limit_bytes=_VMEM_LIMIT_BYTES,
        ),
        cost_estimate=_cost_estimate(rows * lane_w, x2d.dtype, out_dtype, c, q),
        input_output_aliases={0: 0} if alias else {},
    )(x2d)


def polynomial_mask(lmbd, c=1.0, q=2, donate=False):
    """c * lmbd ** q computed in a Pallas TPU kernel (PyTorch PolynomialMask.forward)."""
    orig_shape = lmbd.shape
    in_dtype = lmbd.dtype
    # Match torch type promotion (e.g. float c with integer lmbd -> float result).
    out_dtype = jax.dtypes.canonicalize_dtype(jnp.result_type(in_dtype, c, q))

    n = int(lmbd.size)
    if n == 0:
        return jnp.zeros(orig_shape, out_dtype)

    sub = max(_sublane_multiple(in_dtype), _sublane_multiple(out_dtype))
    itemsize = max(jnp.dtype(in_dtype).itemsize, jnp.dtype(out_dtype).itemsize)
    alias = donate and jnp.dtype(in_dtype) == jnp.dtype(out_dtype)

    # Fast path: widest lane-dense width (multiple of 128) that divides n -> pure reshape.
    lane_w = next((cand for cand in (1024, 512, 256, _LANE) if n % cand == 0), None)
    if lane_w is not None:
        rows = n // lane_w
    else:
        # Ragged size: one kernel pass over a 2-D collapse of the original shape.
        # Block's last dim equals the full array dim, so any width is legal; no pad,
        # no concatenate -> exactly one HBM read + one HBM write.
        if lmbd.ndim >= 2:
            lane_w = orig_shape[-1]
            rows = n // lane_w
        else:
            lane_w = n
            rows = 1
        min_tile = sub * lane_w * itemsize
        if min_tile * 4 > _VMEM_LIMIT_BYTES - (4 << 20):
            # TODO(synk): stream pathological ragged shapes (huge non-128-multiple
            # last dim) via manual DMA; plain JAX fallback keeps correctness for now.
            return _poly(lmbd.astype(out_dtype), c, q).astype(out_dtype)

    block_rows = _pick_block_rows(rows, lane_w, itemsize, sub)
    out2d = _run_2d(lmbd.reshape(rows, lane_w), out_dtype, c, q, block_rows, alias=alias)
    return out2d.reshape(orig_shape)


if __name__ == "__main__":
    key = jax.random.PRNGKey(0)
    k1, k2, k3 = jax.random.split(key, 3)

    # 1) Small, module-consistent input: a tensor of loss-weight lambdas.
    x = jax.random.uniform(k1, (2, 4, 16, 16), dtype=jnp.float32)
    out = jax.block_until_ready(polynomial_mask(x, c=1.0, q=2))
    ref = 1.0 * x ** 2
    assert out.shape == x.shape and out.dtype == x.dtype
    assert jnp.allclose(out, ref, atol=1e-6, rtol=1e-6)

    # 2) Multi-block streaming path (grid >= 2 steps) with c != 1.
    x2 = jax.random.uniform(k2, (2, 4, 256, 256), dtype=jnp.float32)
    out2 = jax.block_until_ready(polynomial_mask(x2, c=0.5, q=3))
    ref2 = 0.5 * x2 ** 3
    assert out2.shape == x2.shape and out2.dtype == x2.dtype
    assert jnp.allclose(out2, ref2, atol=1e-6, rtol=1e-6)

    # 3) Ragged size (numel not a multiple of 128): single-pass kernel, no concat.
    x3 = jax.random.uniform(k3, (3, 5, 7), dtype=jnp.float32)
    out3 = jax.block_until_ready(polynomial_mask(x3, c=2.0, q=2))
    ref3 = 2.0 * x3 ** 2
    assert out3.shape == x3.shape and out3.dtype == x3.dtype
    assert jnp.allclose(out3, ref3, atol=1e-6, rtol=1e-6)

    print("KERNEL_OK")
</pallas_src>

<mosaic_0001>
module attributes {stable_mosaic.version = 11 : i64} {
  func.func @_poly_mask_kernel(%arg0: i32, %arg1: memref<2x1024xf32, #tpu.memory_space<vmem>>, %arg2: memref<2x1024xf32, #tpu.memory_space<vmem>>) attributes {dimension_semantics = [#tpu.dimension_semantics<parallel>], iteration_bounds = array<i64: 1>, scalar_prefetch = 0 : i64, scratch_operands = 0 : i64, tpu.core_type = #tpu.core_type<tc>, window_params = [{transform_indices = @transform_0, window_bounds = array<i64: 2, 1024>}, {transform_indices = @transform_1, window_bounds = array<i64: 2, 1024>}]} {
    %c0 = arith.constant 0 : index
    %c0_0 = arith.constant 0 : index
    %0 = vector.load %arg1[%c0, %c0_0] : memref<2x1024xf32, #tpu.memory_space<vmem>>, vector<2x1024xf32>
    %1 = arith.mulf %0, %0 : vector<2x1024xf32>
    %c0_1 = arith.constant 0 : index
    %c0_2 = arith.constant 0 : index
    %2 = vector.load %arg2[%c0_1, %c0_2] : memref<2x1024xf32, #tpu.memory_space<vmem>>, vector<2x1024xf32>
    tpu.vector_store %arg2[%c0_1, %c0_2], %1 {strides = array<i32>} : memref<2x1024xf32, #tpu.memory_space<vmem>>, vector<2x1024xf32>,
    return
  }
  func.func @transform_0(%arg0: i32) -> (i32, i32) {
    %c0_i32 = arith.constant 0 : i32
    %c0_i32_0 = arith.constant 0 : i32
    return %arg0, %c0_i32 : i32, i32
  }
  func.func @transform_1(%arg0: i32) -> (i32, i32) {
    %c0_i32 = arith.constant 0 : i32
    %c0_i32_0 = arith.constant 0 : i32
    return %arg0, %c0_i32 : i32, i32
  }
}

</mosaic_0001>

<llo_original>
// kernel: tpu_custom_call.1
$region0: #{tpu_custom_call.1}
  #allocation0 [shape = 'u32[]', space=smem, size = 0x4, offset = 0x4, fixed_abs, tag = 'smem constant byte address 0x4 - core index']
  #allocation1 [shape = 'u32[72,128]{1,0:T(1,128)}', space=vmem, size = 0x9000, scoped, tag = 'internal scratch']
  %s0 = inlined_call_operand.hbm [shape: f32[2,1024], index: 0, kind: input, shape index: {}]
  %s1 = inlined_call_operand.hbm [shape: f32[2,1024], index: 1, kind: output, shape index: {}]
  %s2 = sld [smem:[#allocation0]]
  $region18: #{tpu_custom_call.1} parent=0
    _
  %s4 = ssub.s32 1, %s2
  %s5 = scalar_select 0, %s4, %s2
  $region1: #{tpu_custom_call.1} parent=0
    #allocation2 [shape = 'u8[8192]{0}', space=vmem, size = 0x2000, scoped, tag = 'input window, operand 0, single buffered']
    #allocation3 [shape = 's32[1]{0}', space=sflag, size = 0x4, scoped, tag = 'scoped memory for tpu_custom_call.1']
    #allocation4 [shape = 's32[1]{0}', space=sflag, size = 0x4, scoped, tag = 'scoped memory for tpu_custom_call.1']
    #allocation5 [shape = 'u8[8192]{0}', space=vmem, size = 0x2000, scoped, tag = 'output window, operand 0, single buffered']
    %6 = vsyncpa [#allocation3], 0
    %7 = vsyncpa [#allocation4], 0
    // Predicated region
    $region2: #{tpu_custom_call.1} parent=1 // pred_check
      _
    $region3: #{tpu_custom_call.1} parent=1 // pred_check_branch
      %9 = sbr.rel (0) target = $region5
    $region4: #{tpu_custom_call.1} parent=1 // pred_region
      %11 = vsyncadd [#allocation3], 0
      %s13 = sshll.u32 %s0, 4
      %s14 = int_to_ptr.hbm [resolvable:$true] %s13
      %s15 = sshll.u32 [#allocation2], 4
      %s16 = int_to_ptr.vmem [resolvable:$true] %s15
      %18 = dma.hbm_to_vmem [thread:$0]  %s14, 256, %s16, [#allocation3]
    $region5: #{tpu_custom_call.1} parent=1 // pred_fallthru
      _
    // Predicated region
    $region6: #{tpu_custom_call.1} parent=1 // pred_check
      _
    $region7: #{tpu_custom_call.1} parent=1 // pred_check_branch
      %20 = sbr.rel (0) target = $region9
    $region8: #{tpu_custom_call.1} parent=1 // pred_region
      %22 = dma.done [#allocation3], 256
    $region9: #{tpu_custom_call.1} parent=1 // pred_fallthru
      _
    %v23 = vld [vmem:[#allocation2] sm:$0xff]
    %v24 = vld [vmem:[#allocation2 + $0x8] sm:$0xff]
    %v25 = vmul.f32 %v23, %v23
    %v26 = vmul.f32 %v24, %v24
    %27 = vst [vmem:[#allocation5] sm:$0xff] %v25
    %28 = vst [vmem:[#allocation5 + $0x8] sm:$0xff] %v26
    // Predicated region
    $region10: #{tpu_custom_call.1} parent=1 // pred_check
      _
    $region11: #{tpu_custom_call.1} parent=1 // pred_check_branch
      %30 = sbr.rel (0) target = $region13
    $region12: #{tpu_custom_call.1} parent=1 // pred_region
      %32 = vsyncadd [#allocation4], 0
      %s34 = sshll.u32 [#allocation5], 4
      %s35 = int_to_ptr.vmem [resolvable:$true] %s34
      %s36 = sshll.u32 %s1, 4
      %s37 = int_to_ptr.hbm [resolvable:$true] %s36
      %39 = dma.vmem_to_hbm [thread:$0]  %s35, 256, %s37, [#allocation4]
    $region13: #{tpu_custom_call.1} parent=1 // pred_fallthru
      _
    // Predicated region
    $region14: #{tpu_custom_call.1} parent=1 // pred_check
      _
    $region15: #{tpu_custom_call.1} parent=1 // pred_check_branch
      %41 = sbr.rel (0) target = $region17
    $region16: #{tpu_custom_call.1} parent=1 // pred_region
      %43 = dma.done [#allocation4], 256
    $region17: #{tpu_custom_call.1} parent=1 // pred_fallthru
      _
    %44 = vsyncpa [#allocation3], 1
    %45 = vsyncpa [#allocation4], 1

</llo_original>
